<compile_context>
chip_gen: v5e
topology: v5e:2x2
jax: 0.10.0
libtpu: 0.0.40
codegen_flags: <defaults>
</compile_context>

<pallas_src>
import numpy as np
import jax
import jax.numpy as jnp
from jax.experimental import pallas as pl
from jax.experimental.pallas import tpu as pltpu


def _round_up(v, m):
    return ((v + m - 1) // m) * m


# ---------------------------------------------------------------------------
# Kernel 1: full K-sweep Lloyd k-means (all Niter iterations fused).
# Grid axis = K values ("parallel").  Per grid step the kernel:
#   - reads this step's K from SMEM (scalar prefetch),
#   - runs Niter assign/update iterations with the torch break semantics
#     (revert to previous labels and stop when #unique < K and an old
#     labelling exists),
#   - writes lane-dense labels (1, N), centroids (KP, D), counts (KP, 1).
# ---------------------------------------------------------------------------
def _make_kmeans_kernel(N, D, KP, Niter):
    def kernel(kvals_ref, x_ref, c0_ref, labels_ref, c_ref, counts_ref):
        g = pl.program_id(0)
        K = kvals_ref[g]                          # scalar int32 (this step's K)
        x = x_ref[...]                            # (N, D)  f32
        c0 = c0_ref[0]                            # (KP, D) f32 (x[:K] + zero pad)

        ksub_col = jax.lax.broadcasted_iota(jnp.int32, (KP, 1), 0)   # (KP, 1)
        ksub_kn = jax.lax.broadcasted_iota(jnp.int32, (KP, N), 0)    # (KP, N)
        valid_col = ksub_col < K
        inf = jnp.float32(jnp.inf)

        def assign(c):
            # ||x-c||^2 = ||x||^2 + ||c||^2 - 2<x,c>; the ||x||^2 term is
            # constant along the cluster axis so it does not affect argmin.
            cn = jnp.sum(c * c, axis=1, keepdims=True)               # (KP, 1)
            G = jax.lax.dot_general(c, x, (((1,), (1,)), ((), ())),
                                    preferred_element_type=jnp.float32)  # (KP, N)
            d2 = cn - 2.0 * G
            # mask padded cluster slots and NaN centroids (empty clusters)
            d2 = jnp.where(valid_col & jnp.logical_not(jnp.isnan(d2)), d2, inf)
            m = jnp.min(d2, axis=0, keepdims=True)                   # (1, N)
            labels = jnp.min(jnp.where(d2 == m, ksub_kn, KP),
                             axis=0, keepdims=True)                  # (1, N) first-occurrence argmin
            one_hot = (labels == ksub_kn).astype(jnp.float32)        # (KP, N)
            counts = jnp.sum(one_hot, axis=1, keepdims=True)         # (KP, 1)
            sums = jax.lax.dot_general(one_hot, x, (((1,), (0,)), ((), ())),
                                       preferred_element_type=jnp.float32)  # (KP, D)
            return labels, counts, sums

        def body(i, carry):
            c, cl, cnt, stopped = carry           # stopped: (1,1) f32 0/1 flag
            labels, counts, sums = assign(c)
            n_nonempty = jnp.sum((counts > 0.0).astype(jnp.float32),
                                 axis=0, keepdims=True)              # (1, 1)
            degenerate = n_nonempty < K.astype(jnp.float32)
            stopped_b = stopped > 0.5
            # torch: break (keeping previous labels/centroids) only when an
            # old labelling exists (i > 0); first-iteration degeneracy
            # proceeds with the update (NaN centroids for empty clusters).
            do_break = jnp.logical_and(
                degenerate, jnp.logical_and(i > 0, jnp.logical_not(stopped_b)))
            take_new = jnp.logical_and(jnp.logical_not(stopped_b),
                                       jnp.logical_not(do_break))
            c_new = sums / counts                 # 0/0 -> NaN, matching torch
            c_n = jnp.where(take_new, c_new, c)
            cl_n = jnp.where(take_new, labels, cl)
            cnt_n = jnp.where(take_new, counts, cnt)
            stopped_n = jnp.maximum(stopped, do_break.astype(jnp.float32))
            return c_n, cl_n, cnt_n, stopped_n

        init = (c0,
                jnp.zeros((1, N), jnp.int32),
                jnp.zeros((KP, 1), jnp.float32),
                jnp.zeros((1, 1), jnp.float32))
        c_fin, cl_fin, cnt_fin, _ = jax.lax.fori_loop(0, Niter, body, init)

        labels_ref[...] = cl_fin[None]            # (1, 1, N) lane-dense labels
        c_ref[...] = c_fin[None]                  # (1, KP, D)
        counts_ref[...] = cnt_fin[None]           # (1, KP, 1)

    return kernel


def kmeans_sweep(x, c0_all, kvals, KP, Niter):
    N, D = x.shape
    num_K = int(c0_all.shape[0])
    kernel = _make_kmeans_kernel(N, D, KP, Niter)
    grid_spec = pltpu.PrefetchScalarGridSpec(
        num_scalar_prefetch=1,
        grid=(num_K,),
        in_specs=[
            pl.BlockSpec((N, D), lambda g, kv: (0, 0)),         # x resident
            pl.BlockSpec((1, KP, D), lambda g, kv: (g, 0, 0)),  # per-K init centroids
        ],
        out_specs=(
            pl.BlockSpec((1, 1, N), lambda g, kv: (g, 0, 0)),
            pl.BlockSpec((1, KP, D), lambda g, kv: (g, 0, 0)),
            pl.BlockSpec((1, KP, 1), lambda g, kv: (g, 0, 0)),
        ),
    )
    labels, cents, counts = pl.pallas_call(
        kernel,
        grid_spec=grid_spec,
        out_shape=(
            jax.ShapeDtypeStruct((num_K, 1, N), jnp.int32),
            jax.ShapeDtypeStruct((num_K, KP, D), jnp.float32),
            jax.ShapeDtypeStruct((num_K, KP, 1), jnp.float32),
        ),
        compiler_params=pltpu.CompilerParams(
            dimension_semantics=("parallel",)),
    )(kvals, x, c0_all)
    return labels, cents, counts


# ---------------------------------------------------------------------------
# Kernel 2: silhouette scores for ALL K values at once, tiled over row blocks
# of the distance matrix.  dmat row block via Gram form (MXU), per-cluster
# summed distances via one_hot @ dmat^T (MXU), per-sample scores written
# lane-dense as a (num_K, TN) slab per grid step.
# ---------------------------------------------------------------------------
def _make_silhouette_kernel(N, D, KP, NUM_K, TN):
    def kernel(x_full_ref, x_blk_ref, lab_full_ref, lab_blk_ref, out_ref):
        i = pl.program_id(0)
        x_all = x_full_ref[...]                   # (N, D)
        x_blk = x_blk_ref[...]                    # (TN, D)

        # row-block of the full Euclidean distance matrix (Gram form)
        G = jax.lax.dot_general(x_blk, x_all, (((1,), (1,)), ((), ())),
                                preferred_element_type=jnp.float32)   # (TN, N)
        r_blk = jnp.sum(x_blk * x_blk, axis=1, keepdims=True)         # (TN, 1)
        ones_row = jnp.ones((1, D), jnp.float32)
        r_all = jax.lax.dot_general(ones_row, x_all * x_all,
                                    (((1,), (1,)), ((), ())),
                                    preferred_element_type=jnp.float32)  # (1, N)
        d2 = jnp.maximum(r_blk + r_all - 2.0 * G, 0.0)   # clamp rounding negatives
        dmat = jnp.sqrt(d2)                                            # (TN, N)
        row_g = jax.lax.broadcasted_iota(jnp.int32, (TN, N), 0) + i * TN
        col_g = jax.lax.broadcasted_iota(jnp.int32, (TN, N), 1)
        dmat = jnp.where(row_g == col_g, 0.0, dmat)      # exact-zero diagonal

        ksub_all = jax.lax.broadcasted_iota(jnp.int32, (KP, N), 0)
        ksub_blk = jax.lax.broadcasted_iota(jnp.int32, (KP, TN), 0)
        inf = jnp.float32(jnp.inf)

        rows = []
        for g in range(NUM_K):                    # static unrolled loop over K
            lab_all = lab_full_ref[g]             # (1, N)  int32
            lab_blk = lab_blk_ref[g]              # (1, TN) int32
            oh_all = (lab_all == ksub_all).astype(jnp.float32)   # (KP, N)
            oh_blk = (lab_blk == ksub_blk).astype(jnp.float32)   # (KP, TN)
            counts = jnp.sum(oh_all, axis=1, keepdims=True)      # (KP, 1)
            # summed distance from every block sample to every cluster (MXU)
            A = jax.lax.dot_general(oh_all, dmat, (((1,), (1,)), ((), ())),
                                    preferred_element_type=jnp.float32)  # (KP, TN)
            own_count = jnp.sum(oh_blk * counts, axis=0, keepdims=True)  # (1, TN)
            a_sum = jnp.sum(A * oh_blk, axis=0, keepdims=True)           # (1, TN)
            a = a_sum / jnp.maximum(own_count - 1.0, 1.0)                # intra mean
            mean_inter = A / jnp.maximum(counts, 1.0)                    # (KP, TN)
            other_ok = (counts > 0.0) & (oh_blk == 0.0)
            b = jnp.min(jnp.where(other_ok, mean_inter, inf),
                        axis=0, keepdims=True)                           # (1, TN)
            s = jnp.where(own_count > 1.0, (b - a) / jnp.maximum(b, a), 0.0)
            rows.append(s)
        out_ref[...] = jnp.concatenate(rows, axis=0)   # (NUM_K, TN) lane-dense

    return kernel


def silhouette_sweep(x, labels3, KP):
    N, D = x.shape
    num_K = int(labels3.shape[0])
    TN = 128 if N % 128 == 0 else N               # row-block size
    kernel = _make_silhouette_kernel(N, D, KP, num_K, TN)
    out = pl.pallas_call(
        kernel,
        grid=(N // TN,),
        in_specs=[
            pl.BlockSpec((N, D), lambda i: (0, 0)),             # full x (resident)
            pl.BlockSpec((TN, D), lambda i: (i, 0)),            # pipelined row block
            pl.BlockSpec((num_K, 1, N), lambda i: (0, 0, 0)),   # all labels (resident)
            pl.BlockSpec((num_K, 1, TN), lambda i: (0, 0, i)),  # row-block labels
        ],
        out_specs=pl.BlockSpec((num_K, TN), lambda i: (0, i)),
        out_shape=jax.ShapeDtypeStruct((num_K, N), jnp.float32),
        compiler_params=pltpu.CompilerParams(
            dimension_semantics=("parallel",)),
    )(x, x, labels3, labels3)
    return out


# ---------------------------------------------------------------------------
# Module-level wrapper mirroring the PyTorch control flow.
# ---------------------------------------------------------------------------
class DC_IterativeKMeans:
    def __init__(self, min_n_cluster: int = 5, max_n_cluster: int = 10,
                 Niter: int = 10, verbose: bool = False,
                 random_centroid_init: bool = False):
        self.min_n_cluster = min_n_cluster
        self.max_n_cluster = max_n_cluster if max_n_cluster > min_n_cluster else min_n_cluster
        self.Niter = Niter if Niter > 1 else 1
        self.verbose = verbose
        self.random_centroid_init = random_centroid_init
        # TODO(synk): kpp_init (k-means++ multinomial sampling) is not ported;
        # the default c = x[:K] init path is used even when random_centroid_init=True.

    def forward(self, x):
        x = jnp.asarray(x, jnp.float32)
        N, D = x.shape
        min_n, max_n = self.min_n_cluster, self.max_n_cluster
        k_list = list(range(min_n, max_n + 1))
        num_K = len(k_list)
        KP = max(8, _round_up(max(max_n, 2), 8))
        kvals = jnp.asarray(k_list, dtype=jnp.int32)

        # centroid init per K: c0[g, :K_g] = x[:K_g], zero padding elsewhere
        m = min(KP, N)
        x_head = jnp.zeros((KP, D), jnp.float32).at[:m].set(x[:m])
        row_idx = jnp.arange(KP, dtype=jnp.int32)[None, :, None]
        c0_all = jnp.where(row_idx < kvals[:, None, None], x_head[None], 0.0)

        labels3, cents, counts3 = kmeans_sweep(x, c0_all, kvals, KP, self.Niter)
        s_per_sample = silhouette_sweep(x, labels3, KP)            # (num_K, N)
        raw_scores = jnp.sum(s_per_sample, axis=1) / float(N)      # (num_K,)
        n_unique = jnp.sum((counts3[:, :, 0] > 0).astype(jnp.int32), axis=1)

        # host-side model selection (mirrors the torch try/except loop);
        # exactly two device->host transfers per forward.
        n_unique_h = np.asarray(jax.device_get(n_unique))
        scores_h = np.asarray(jax.device_get(raw_scores))

        s_scores = -np.ones(num_K, dtype=np.float32)
        best_K = -1
        best_cl = jnp.zeros(N, dtype=jnp.float32)
        best_c = jnp.zeros((1, D), dtype=jnp.float32)
        best_score = -1
        for idx, K in enumerate(k_list):
            uniq = int(n_unique_h[idx])
            # failed k-means (unique < K) or invalid silhouette -> skip, like
            # the torch try/except (score stays -1).
            ok = (K >= 2) and (K <= N) and (uniq == K) and (1 < uniq < N)
            if not ok:
                if self.verbose:
                    print(f"Error;\tK: {K};\tuniq: {uniq}")
                continue
            score = float(scores_h[idx])
            if score > float(s_scores.max()):
                best_K = K
                best_cl = labels3[idx, 0]          # (N,) int32 labels
                best_c = cents[idx, :K]            # (K, D)
                best_score = score
            s_scores[idx] = score
        return best_cl, best_c, best_score, best_K, jnp.asarray(s_scores)

    __call__ = forward


if __name__ == "__main__":
    key = jax.random.PRNGKey(0)
    N, D = 64, 16
    n_blobs = 8
    kc, kn = jax.random.split(key)
    centers = 6.0 * jax.random.normal(kc, (n_blobs, D), dtype=jnp.float32)
    assign = jnp.arange(N) % n_blobs
    x = (centers[assign] + 0.3 * jax.random.normal(kn, (N, D), dtype=jnp.float32)
         ).astype(jnp.float32)

    model = DC_IterativeKMeans(min_n_cluster=5, max_n_cluster=10, Niter=10)
    best_cl, best_c, best_score, best_K, s_scores = model(x)
    jax.block_until_ready((best_cl, best_c, s_scores))
    print("KERNEL_OK")
</pallas_src>

<mosaic_0001>
module attributes {stable_mosaic.version = 11 : i64} {
  func.func @kernel(%arg0: i32, %arg1: memref<6xi32, #tpu.memory_space<smem>>, %arg2: memref<64x16xf32, #tpu.memory_space<vmem>>, %arg3: memref<1x16x16xf32, #tpu.memory_space<vmem>>, %arg4: memref<1x1x64xi32, #tpu.memory_space<vmem>>, %arg5: memref<1x16x16xf32, #tpu.memory_space<vmem>>, %arg6: memref<1x16x1xf32, #tpu.memory_space<vmem>>) attributes {dimension_semantics = [#tpu.dimension_semantics<parallel>], iteration_bounds = array<i64: 6>, scalar_prefetch = 1 : i64, scratch_operands = 0 : i64, tpu.core_type = #tpu.core_type<tc>, window_params = [{pipeline_mode = #tpu.pipeline_mode<synchronous>, transform_indices = @transform_0, window_bounds = array<i64: 64, 16>}, {transform_indices = @transform_1, window_bounds = array<i64: 1, 16, 16>}, {transform_indices = @transform_2, window_bounds = array<i64: 1, 1, 64>}, {transform_indices = @transform_3, window_bounds = array<i64: 1, 16, 16>}, {transform_indices = @transform_4, window_bounds = array<i64: 1, 16, 1>}]} {
    %0 = arith.index_cast %arg0 : i32 to index
    %1 = memref.load %arg1[%0] : memref<6xi32, #tpu.memory_space<smem>>
    %c0 = arith.constant 0 : index
    %c0_0 = arith.constant 0 : index
    %2 = vector.load %arg2[%c0, %c0_0] : memref<64x16xf32, #tpu.memory_space<vmem>>, vector<64x16xf32>
    %c0_1 = arith.constant 0 : index
    %c0_2 = arith.constant 0 : index
    %c0_3 = arith.constant 0 : index
    %3 = vector.load %arg3[%c0_1, %c0_2, %c0_3] : memref<1x16x16xf32, #tpu.memory_space<vmem>>, vector<1x16x16xf32>
    %4 = vector.shape_cast %3 : vector<1x16x16xf32> to vector<16x16xf32>
    %5 = tpu.iota {dimensions = array<i32: 0>} : vector<16x1xi32>
    %6 = tpu.iota {dimensions = array<i32: 0>} : vector<16x64xi32>
    %7 = vector.broadcast %1 : i32 to vector<16x1xi32>
    %8 = arith.cmpi slt, %5, %7 : vector<16x1xi32>
    %c0_i32 = arith.constant 0 : i32
    %9 = vector.broadcast %c0_i32 : i32 to vector<1x64xi32>
    %cst = arith.constant 0.000000e+00 : f32
    %10 = vector.broadcast %cst : f32 to vector<16x1xf32>
    %cst_4 = arith.constant 0.000000e+00 : f32
    %11 = vector.broadcast %cst_4 : f32 to vector<1x1xf32>
    %cst_5 = arith.constant 0x7F800000 : f32
    %c0_i32_6 = arith.constant 0 : i32
    %c10_i32 = arith.constant 10 : i32
    %12 = arith.addi %c0_i32_6, %c10_i32 : i32
    %c1_i32 = arith.constant 1 : i32
    %13:4 = scf.for %arg7 = %c0_i32_6 to %12 step %c1_i32 iter_args(%arg8 = %4, %arg9 = %9, %arg10 = %10, %arg11 = %11) -> (vector<16x16xf32>, vector<1x64xi32>, vector<16x1xf32>, vector<1x1xf32>)  : i32 {
      %20 = arith.mulf %arg8, %arg8 : vector<16x16xf32>
      %cst_17 = arith.constant dense<0.000000e+00> : vector<16xf32>
      %21 = vector.multi_reduction <add>, %20, %cst_17 [1] : vector<16x16xf32> to vector<16xf32>
      %22 = vector.shape_cast %21 : vector<16xf32> to vector<16x1xf32>
      %cst_18 = arith.constant dense<0.000000e+00> : vector<16x64xf32>
      %23 = tpu.matmul %arg8, %2, %cst_18 {dimension_numbers = #tpu.dot_dimension_numbers<[1], [1], [0], [0], [0, 0, 1, 0], [], []>} : vector<16x16xf32>, vector<64x16xf32>, vector<16x64xf32> -> vector<16x64xf32>
      %cst_19 = arith.constant 2.000000e+00 : f32
      %24 = vector.broadcast %cst_19 : f32 to vector<16x64xf32>
      %25 = arith.mulf %24, %23 : vector<16x64xf32>
      %26 = vector.broadcast %22 : vector<16x1xf32> to vector<16x64xf32>
      %27 = arith.subf %26, %25 : vector<16x64xf32>
      %28 = arith.cmpf one, %27, %27 : vector<16x64xf32>
      %cst_20 = arith.constant dense<true> : vector<16x64xi1>
      %29 = arith.xori %28, %cst_20 : vector<16x64xi1>
      %30 = vector.broadcast %8 : vector<16x1xi1> to vector<16x64xi1>
      %31 = arith.andi %30, %29 : vector<16x64xi1>
      %32 = vector.broadcast %cst_5 : f32 to vector<16x64xf32>
      %33 = arith.select %31, %27, %32 : vector<16x64xi1>, vector<16x64xf32>
      %cst_21 = arith.constant dense<0x7F800000> : vector<64xf32>
      %34 = vector.multi_reduction <minimumf>, %33, %cst_21 [0] : vector<16x64xf32> to vector<64xf32>
      %35 = vector.shape_cast %34 : vector<64xf32> to vector<1x64xf32>
      %36 = vector.broadcast %35 : vector<1x64xf32> to vector<16x64xf32>
      %37 = arith.cmpf oeq, %33, %36 : vector<16x64xf32>
      %c16_i32 = arith.constant 16 : i32
      %38 = vector.broadcast %c16_i32 : i32 to vector<16x64xi32>
      %39 = arith.select %37, %6, %38 : vector<16x64xi1>, vector<16x64xi32>
      %cst_22 = arith.constant dense<2147483647> : vector<64xi32>
      %40 = vector.multi_reduction <minsi>, %39, %cst_22 [0] : vector<16x64xi32> to vector<64xi32>
      %41 = vector.shape_cast %40 : vector<64xi32> to vector<1x64xi32>
      %42 = vector.broadcast %41 : vector<1x64xi32> to vector<16x64xi32>
      %43 = arith.cmpi eq, %42, %6 : vector<16x64xi32>
      %44 = arith.extui %43 : vector<16x64xi1> to vector<16x64xi32>
      %45 = arith.sitofp %44 : vector<16x64xi32> to vector<16x64xf32>
      %cst_23 = arith.constant dense<0.000000e+00> : vector<16xf32>
      %46 = vector.multi_reduction <add>, %45, %cst_23 [1] : vector<16x64xf32> to vector<16xf32>
      %47 = vector.shape_cast %46 : vector<16xf32> to vector<16x1xf32>
      %cst_24 = arith.constant dense<0.000000e+00> : vector<16x16xf32>
      %48 = tpu.matmul %45, %2, %cst_24 {dimension_numbers = #tpu.dot_dimension_numbers<[1], [0], [0], [1], [0, 0, 1, 1], [], []>} : vector<16x64xf32>, vector<64x16xf32>, vector<16x16xf32> -> vector<16x16xf32>
      %cst_25 = arith.constant 0.000000e+00 : f32
      %49 = vector.broadcast %cst_25 : f32 to vector<16x1xf32>
      %50 = arith.cmpf ogt, %47, %49 : vector<16x1xf32>
      %51 = arith.extui %50 : vector<16x1xi1> to vector<16x1xi32>
      %52 = arith.sitofp %51 : vector<16x1xi32> to vector<16x1xf32>
      %cst_26 = arith.constant dense<0.000000e+00> : vector<1xf32>
      %53 = vector.multi_reduction <add>, %52, %cst_26 [0] : vector<16x1xf32> to vector<1xf32>
      %54 = vector.shape_cast %53 : vector<1xf32> to vector<1x1xf32>
      %55 = arith.sitofp %1 : i32 to f32
      %56 = vector.broadcast %55 : f32 to vector<1x1xf32>
      %57 = arith.cmpf olt, %54, %56 : vector<1x1xf32>
      %cst_27 = arith.constant 5.000000e-01 : f32
      %58 = vector.broadcast %cst_27 : f32 to vector<1x1xf32>
      %59 = arith.cmpf ogt, %arg11, %58 : vector<1x1xf32>
      %c0_i32_28 = arith.constant 0 : i32
      %60 = arith.cmpi sgt, %arg7, %c0_i32_28 : i32
      %cst_29 = arith.constant dense<true> : vector<1x1xi1>
      %61 = arith.xori %59, %cst_29 : vector<1x1xi1>
      %62 = vector.broadcast %60 : i1 to vector<1x1xi1>
      %63 = arith.andi %62, %61 : vector<1x1xi1>
      %64 = arith.andi %57, %63 : vector<1x1xi1>
      %cst_30 = arith.constant dense<true> : vector<1x1xi1>
      %65 = arith.xori %59, %cst_30 : vector<1x1xi1>
      %cst_31 = arith.constant dense<true> : vector<1x1xi1>
      %66 = arith.xori %64, %cst_31 : vector<1x1xi1>
      %67 = arith.andi %65, %66 : vector<1x1xi1>
      %68 = vector.broadcast %47 : vector<16x1xf32> to vector<16x16xf32>
      %69 = arith.divf %48, %68 : vector<16x16xf32>
      %70 = vector.shape_cast %67 : vector<1x1xi1> to vector<1x1xi1>
      %71 = vector.broadcast %70 : vector<1x1xi1> to vector<16x16xi1>
      %72 = arith.select %71, %69, %arg8 : vector<16x16xi1>, vector<16x16xf32>
      %73 = vector.shape_cast %67 : vector<1x1xi1> to vector<1x1xi1>
      %74 = vector.broadcast %73 : vector<1x1xi1> to vector<1x64xi1>
      %75 = arith.select %74, %41, %arg9 : vector<1x64xi1>, vector<1x64xi32>
      %76 = vector.shape_cast %67 : vector<1x1xi1> to vector<1x1xi1>
      %77 = vector.broadcast %76 : vector<1x1xi1> to vector<16x1xi1>
      %78 = arith.select %77, %47, %arg10 : vector<16x1xi1>, vector<16x1xf32>
      %79 = arith.extui %64 : vector<1x1xi1> to vector<1x1xi32>
      %80 = arith.sitofp %79 : vector<1x1xi32> to vector<1x1xf32>
      %81 = arith.maximumf %arg11, %80 : vector<1x1xf32>
      scf.yield %72, %75, %78, %81 : vector<16x16xf32>, vector<1x64xi32>, vector<16x1xf32>, vector<1x1xf32>
    }
    %c10_i32_7 = arith.constant 10 : i32
    %14 = vector.shape_cast %13#1 : vector<1x64xi32> to vector<1x1x64xi32>
    %c0_8 = arith.constant 0 : index
    %c0_9 = arith.constant 0 : index
    %c0_10 = arith.constant 0 : index
    %15 = vector.load %arg4[%c0_8, %c0_9, %c0_10] : memref<1x1x64xi32, #tpu.memory_space<vmem>>, vector<1x1x64xi32>
    tpu.vector_store %arg4[%c0_8, %c0_9, %c0_10], %14 {strides = array<i32>} : memref<1x1x64xi32, #tpu.memory_space<vmem>>, vector<1x1x64xi32>,
    %16 = vector.shape_cast %13#0 : vector<16x16xf32> to vector<1x16x16xf32>
    %c0_11 = arith.constant 0 : index
    %c0_12 = arith.constant 0 : index
    %c0_13 = arith.constant 0 : index
    %17 = vector.load %arg5[%c0_11, %c0_12, %c0_13] : memref<1x16x16xf32, #tpu.memory_space<vmem>>, vector<1x16x16xf32>
    tpu.vector_store %arg5[%c0_11, %c0_12, %c0_13], %16 {strides = array<i32>} : memref<1x16x16xf32, #tpu.memory_space<vmem>>, vector<1x16x16xf32>,
    %18 = vector.shape_cast %13#2 : vector<16x1xf32> to vector<1x16x1xf32>
    %c0_14 = arith.constant 0 : index
    %c0_15 = arith.constant 0 : index
    %c0_16 = arith.constant 0 : index
    %19 = vector.load %arg6[%c0_14, %c0_15, %c0_16] : memref<1x16x1xf32, #tpu.memory_space<vmem>>, vector<1x16x1xf32>
    tpu.vector_store %arg6[%c0_14, %c0_15, %c0_16], %18 {strides = array<i32>} : memref<1x16x1xf32, #tpu.memory_space<vmem>>, vector<1x16x1xf32>,
    return
  }
  func.func @transform_0(%arg0: i32, %arg1: memref<6xi32, #tpu.memory_space<smem>>) -> (i32, i32) {
    %c0_i32 = arith.constant 0 : i32
    %c0_i32_0 = arith.constant 0 : i32
    %c0_i32_1 = arith.constant 0 : i32
    return %c0_i32, %c0_i32_0 : i32, i32
  }
  func.func @transform_1(%arg0: i32, %arg1: memref<6xi32, #tpu.memory_space<smem>>) -> (i32, i32, i32) {
    %c0_i32 = arith.constant 0 : i32
    %c0_i32_0 = arith.constant 0 : i32
    %c0_i32_1 = arith.constant 0 : i32
    return %arg0, %c0_i32, %c0_i32_0 : i32, i32, i32
  }
  func.func @transform_2(%arg0: i32, %arg1: memref<6xi32, #tpu.memory_space<smem>>) -> (i32, i32, i32) {
    %c0_i32 = arith.constant 0 : i32
    %c0_i32_0 = arith.constant 0 : i32
    %c0_i32_1 = arith.constant 0 : i32
    return %arg0, %c0_i32, %c0_i32_0 : i32, i32, i32
  }
  func.func @transform_3(%arg0: i32, %arg1: memref<6xi32, #tpu.memory_space<smem>>) -> (i32, i32, i32) {
    %c0_i32 = arith.constant 0 : i32
    %c0_i32_0 = arith.constant 0 : i32
    %c0_i32_1 = arith.constant 0 : i32
    return %arg0, %c0_i32, %c0_i32_0 : i32, i32, i32
  }
  func.func @transform_4(%arg0: i32, %arg1: memref<6xi32, #tpu.memory_space<smem>>) -> (i32, i32, i32) {
    %c0_i32 = arith.constant 0 : i32
    %c0_i32_0 = arith.constant 0 : i32
    %c0_i32_1 = arith.constant 0 : i32
    return %arg0, %c0_i32, %c0_i32_0 : i32, i32, i32
  }
}

</mosaic_0001>

<llo_original>
// kernel: tpu_custom_call.1
$region0: #{tpu_custom_call.1}
  #allocation0 [shape = 'u32[]', space=smem, size = 0x4, offset = 0x4, fixed_abs, tag = 'smem constant byte address 0x4 - core index']
  #allocation1 [shape = 'u32[72,128]{1,0:T(1,128)}', space=vmem, size = 0x9000, scoped, tag = 'internal scratch']
  #allocation2 [shape = 's32[1]{0}', space=sflag, size = 0x4, scoped, tag = 'scoped memory for tpu_custom_call.1']
  #allocation3 [shape = 'u8[512]{0}', space=smem, size = 0x200, scoped, tag = 'prefetched SMEM operand 0']
  %s0 = inlined_call_operand.vmem [shape: s32[6], index: 0, kind: input, shape index: {}]
  %s1 = inlined_call_operand.vmem [shape: f32[64,16], index: 1, kind: input, shape index: {}]
  %s2 = inlined_call_operand.hbm [shape: f32[6,16,16], index: 2, kind: input, shape index: {}]
  %s3 = inlined_call_operand.hbm [shape: s32[6,1,64], index: 3, kind: output, shape index: {0}]
  %s4 = inlined_call_operand.hbm [shape: f32[6,16,16], index: 4, kind: output, shape index: {1}]
  %s5 = inlined_call_operand.vmem [shape: f32[6,16,1], index: 5, kind: output, shape index: {2}]
  %6 = xla_tuple %s3, %s4, %s5
  %s7 = sld [smem:[#allocation0]]
  $region68: #{tpu_custom_call.1} parent=0
    _
  %s9 = ssub.s32 1, %s7
  %s10 = scalar_select 0, %s9, %s7
  %s12 = sshll.u32 %s0, 4
  %s13 = int_to_ptr.vmem [resolvable:$true] %s12
  %15 = dma.vmem_to_smem %s13, 16, [#allocation3], [#allocation2]
  %17 = dma.done [#allocation2], 16
  %18 = sfence
  $region1: #{tpu_custom_call.1} parent=0
    #allocation4 [shape = 'u8[16384]{0}', space=vmem, size = 0x4000, scoped, tag = 'input window, operand 2']
    #allocation5 [shape = 's32[2]{0}', space=sflag, size = 0x8, scoped, tag = 'scoped memory for tpu_custom_call.1']
    #allocation6 [shape = 's32[2]{0}', space=sflag, size = 0x8, scoped, tag = 'scoped memory for tpu_custom_call.1']
    #allocation7 [shape = 'u8[1024]{0}', space=vmem, size = 0x400, scoped, tag = 'output window, operand 0']
    #allocation8 [shape = 'u8[16384]{0}', space=vmem, size = 0x4000, scoped, tag = 'output window, operand 1']
    #allocation9 [shape = 's32[2]{0}', space=sflag, size = 0x8, scoped, tag = 'scoped memory for tpu_custom_call.1']
    %19 = vsyncpa [#allocation5], 0
    %s20 = scalar_lea.sflag [#allocation5], 1
    %21 = vsyncpa %s20, 0
    %22 = vsyncpa [#allocation6], 0
    %s23 = scalar_lea.sflag [#allocation6], 1
    %24 = vsyncpa %s23, 0
    %25 = vsyncpa [#allocation9], 0
    %s26 = scalar_lea.sflag [#allocation9], 1
    %27 = vsyncpa %s26, 0
    loop: start=0, step=1, limit=8
    $region2: #{tpu_custom_call.1} parent=1 // loop_pre_header
      _
    $region3: #{tpu_custom_call.1} parent=1 // loop_header
      %s29 = sphi 0, %s33
      %p30 = scmp.ge.s32.totalorder %s29, 8
      %s37 = sphi 0, %s37
      %s39 = sphi 0, %s37
      %s40 = sphi 0, %s39
      %s54 = sphi 0, %s40
      %s60 = sphi 0, %s62
      %s63 = sphi 0, %s60
      %s64 = sphi 0, %s63
      %s80 = sphi 0, %s64
      %s86 = sphi 0, %s88
      %s89 = sphi 0, %s86
      %s90 = sphi 0, %s89
      %s106 = sphi 0, %s90
      %s112 = sphi 0, %s114
      %s115 = sphi 0, %s112
      %s116 = sphi 0, %s115
      %s132 = sphi 0, %s116
      %s138 = sphi 0, %s140
      %s141 = sphi 0, %s138
      %s142 = sphi 0, %s141
      %s158 = sphi 0, %s142
    $region4: #{tpu_custom_call.1} parent=1 // loop_header_branch
      %32 = sbr.rel (%p30) target = $region8
    $region5: #{tpu_custom_call.1} parent=1 // loop_body
      %s34 = ssub.s32 %s29, 1
      %s35 = ssub.s32 %s29, 2
      %s36 = sadd.s32 %s29, 1
      %s38 = sadd.s32 %s37, 1
      %p41 = scmp.eq.s32.totalorder %s29, 5
      %p42 = scmp.ne.s32.totalorder %s37, %s39
      %p43 = scmp.eq.s32.totalorder %s29, 0
      %p44 = por %p42, %p43
      %p45 = scmp.ne.s32.totalorder %s37, %s39
      %p46 = scmp.eq.s32.totalorder %s34, 5
      %p47 = por %p45, %p46
      %p48 = scmp.ne.s32.totalorder %s39, %s40
      %p49 = scmp.eq.s32.totalorder %s34, 0
      %p50 = por %p48, %p49
      %p51 = scmp.ne.s32.totalorder %s39, %s40
      %p52 = scmp.eq.s32.totalorder %s35, 5
      %p53 = por %p51, %p52
      %p55 = scmp.ne.s32.totalorder %s40, %s54
      %p56 = scmp.eq.s32.totalorder %s35, 0
      %p57 = por %p55, %p56
      %s58 = ssub.s32 %s29, %s36
      %p59 = scmp.eq.s32.totalorder %s58, 0
      %s61 = sadd.s32 %s60, 1
      %s62 = scalar_select %p59, %s60, %s61
      %p65 = pneg %p59
      %p66 = scmp.eq.s32.totalorder %s29, 5
      %p67 = por %p65, %p66
      %p68 = scmp.ne.s32.totalorder %s60, %s63
      %p69 = scmp.eq.s32.totalorder %s29, 0
      %p70 = por %p68, %p69
      %p71 = scmp.ne.s32.totalorder %s60, %s63
      %p72 = scmp.eq.s32.totalorder %s34, 5
      %p73 = por %p71, %p72
      %p74 = scmp.ne.s32.totalorder %s63, %s64
      %p75 = scmp.eq.s32.totalorder %s34, 0
      %p76 = por %p74, %p75
      %p77 = scmp.ne.s32.totalorder %s63, %s64
      %p78 = scmp.eq.s32.totalorder %s35, 5
      %p79 = por %p77, %p78
      %p81 = scmp.ne.s32.totalorder %s64, %s80
      %p82 = scmp.eq.s32.totalorder %s35, 0
      %p83 = por %p81, %p82
      %s84 = ssub.s32 %s29, %s36
      %p85 = scmp.eq.s32.totalorder %s84, 0
      %s87 = sadd.s32 %s86, 1
      %s88 = scalar_select %p85, %s86, %s87
      %p91 = pneg %p85
      %p92 = scmp.eq.s32.totalorder %s29, 5
      %p93 = por %p91, %p92
      %p94 = scmp.ne.s32.totalorder %s86, %s89
      %p95 = scmp.eq.s32.totalorder %s29, 0
      %p96 = por %p94, %p95
      %p97 = scmp.ne.s32.totalorder %s86, %s89
      %p98 = scmp.eq.s32.totalorder %s34, 5
      %p99 = por %p97, %p98
      %p100 = scmp.ne.s32.totalorder %s89, %s90
      %p101 = scmp.eq.s32.totalorder %s34, 0
      %p102 = por %p100, %p101
      %p103 = scmp.ne.s32.totalorder %s89, %s90
      %p104 = scmp.eq.s32.totalorder %s35, 5
      %p105 = por %p103, %p104
      %p107 = scmp.ne.s32.totalorder %s90, %s106
      %p108 = scmp.eq.s32.totalorder %s35, 0
      %p109 = por %p107, %p108
      %s110 = ssub.s32 %s29, %s36
      %p111 = scmp.eq.s32.totalorder %s110, 0
      %s113 = sadd.s32 %s112, 1
      %s114 = scalar_select %p111, %s112, %s113
      %p117 = pneg %p111
      %p118 = scmp.eq.s32.totalorder %s29, 5
      %p119 = por %p117, %p118
      %p120 = scmp.ne.s32.totalorder %s112, %s115
      %p121 = scmp.eq.s32.totalorder %s29, 0
      %p122 = por %p120, %p121
      %p123 = scmp.ne.s32.totalorder %s112, %s115
      %p124 = scmp.eq.s32.totalorder %s34, 5
      %p125 = por %p123, %p124
      %p126 = scmp.ne.s32.totalorder %s115, %s116
      %p127 = scmp.eq.s32.totalorder %s34, 0
      %p128 = por %p126, %p127
      %p129 = scmp.ne.s32.totalorder %s115, %s116
      %p130 = scmp.eq.s32.totalorder %s35, 5
      %p131 = por %p129, %p130
      %p133 = scmp.ne.s32.totalorder %s116, %s132
      %p134 = scmp.eq.s32.totalorder %s35, 0
      %p135 = por %p133, %p134
      %s136 = ssub.s32 %s29, %s36
      %p137 = scmp.eq.s32.totalorder %s136, 0
      %s139 = sadd.s32 %s138, 1
      %s140 = scalar_select %p137, %s138, %s139
      %p143 = pneg %p137
      %p144 = scmp.eq.s32.totalorder %s29, 5
      %p145 = por %p143, %p144
      %p146 = scmp.ne.s32.totalorder %s138, %s141
      %p147 = scmp.eq.s32.totalorder %s29, 0
      %p148 = por %p146, %p147
      %p149 = scmp.ne.s32.totalorder %s138, %s141
      %p150 = scmp.eq.s32.totalorder %s34, 5
      %p151 = por %p149, %p150
      %p152 = scmp.ne.s32.totalorder %s141, %s142
      %p153 = scmp.eq.s32.totalorder %s34, 0
      %p154 = por %p152, %p153
      %p155 = scmp.ne.s32.totalorder %s141, %s142
      %p156 = scmp.eq.s32.totalorder %s35, 5
      %p157 = por %p155, %p156
      %p159 = scmp.ne.s32.totalorder %s142, %s158
      %p160 = scmp.eq.s32.totalorder %s35, 0
      %p161 = por %p159, %p160
      %p162 = scmp.le.s32.totalorder 1, %s29
      %p163 = scmp.lt.s32.totalorder %s29, 7
      %p164 = pnand %p162, %p163
      %p165 = pneg %p164
      // Predicated region
      $region9: #{tpu_custom_call.1} parent=5 // pred_check
        _
      $region10: #{tpu_custom_call.1} parent=5 // pred_check_branch
        %167 = sbr.rel (%p164) target = $region12
      $region11: #{tpu_custom_call.1} parent=5 // pred_region
        %s168 = ssub.s32 %s29, 1
        // Predicated region
        $region13: #{tpu_custom_call.1} parent=11 // pred_check
          %p169 = pneg %p50
        $region14: #{tpu_custom_call.1} parent=11 // pred_check_branch
          %171 = sbr.rel (%p169) target = $region16
        $region15: #{tpu_custom_call.1} parent=11 // pred_region
          _
        $region16: #{tpu_custom_call.1} parent=11 // pred_fallthru
          _
      $region12: #{tpu_custom_call.1} parent=5 // pred_fallthru
        _
      %p172 = scmp.lt.s32.totalorder %s29, 6
      // Predicated region
      $region17: #{tpu_custom_call.1} parent=5 // pred_check
        %p173 = pneg %p172
      $region18: #{tpu_custom_call.1} parent=5 // pred_check_branch
        %175 = sbr.rel (%p173) target = $region20
      $region19: #{tpu_custom_call.1} parent=5 // pred_region
        // Predicated region
        $region21: #{tpu_custom_call.1} parent=19 // pred_check
          %p176 = pneg %p70
        $region22: #{tpu_custom_call.1} parent=19 // pred_check_branch
          %178 = sbr.rel (%p176) target = $region24
        $region23: #{tpu_custom_call.1} parent=19 // pred_region
          %s179 = sand.u32 %s60, 1
          %s180 = scalar_lea.sflag [#allocation5], %s179
          %s181 = sand.u32 %s60, 1
          %s182 = smul.addr %s181, 16
          %s183 = scalar_lea.vmem [#allocation4], %s182
          %185 = vsyncadd %s180, 0
          %s186 = smul.addr %s29, 2
          %s187 = smul.addr %s186, 8
          %s188 = scalar_lea.hbm %s2, %s187
          %s189 = sshll.u32 %s188, 4
          %s190 = int_to_ptr.hbm [resolvable:$true] %s189
          %s191 = sshll.u32 %s183, 4
          %s192 = int_to_ptr.vmem [resolvable:$true] %s191
          %197 = dma.hbm_to_vmem [thread:$0]  %s190, 256, %s192, %s180, 128, 128, 8
        $region24: #{tpu_custom_call.1} parent=19 // pred_fallthru
          _
      $region20: #{tpu_custom_call.1} parent=5 // pred_fallthru
        _
      %p198 = scmp.le.s32.totalorder 1, %s29
      %p199 = scmp.lt.s32.totalorder %s29, 7
      %p200 = pnand %p198, %p199
      %p201 = pneg %p200
      // Predicated region
      $region25: #{tpu_custom_call.1} parent=5 // pred_check
        _
      $region26: #{tpu_custom_call.1} parent=5 // pred_check_branch
        %203 = sbr.rel (%p200) target = $region28
      $region27: #{tpu_custom_call.1} parent=5 // pred_region
        %s204 = ssub.s32 %s29, 1
        %s205 = sand.u32 %s63, 1
        %s206 = scalar_lea.sflag [#allocation5], %s205
        %s207 = sand.u32 %s63, 1
        %s208 = smul.addr %s207, 16
        %s209 = scalar_lea.vmem [#allocation4], %s208
        // Predicated region
        $region29: #{tpu_custom_call.1} parent=27 // pred_check
          %p210 = pneg %p76
        $region30: #{tpu_custom_call.1} parent=27 // pred_check_branch
          %212 = sbr.rel (%p210) target = $region32
        $region31: #{tpu_custom_call.1} parent=27 // pred_region
          %214 = dma.done %s206, 256
        $region32: #{tpu_custom_call.1} parent=27 // pred_fallthru
          _
        %p215 = pneg %p50
        %p216 = pneg %p47
        %s217 = sand.u32 %s63, 1
        %s218 = scalar_lea.sflag [#allocation5], %s217
        %s219 = sand.u32 %s63, 1
        %s220 = smul.addr %s219, 16
        %s221 = scalar_lea.vmem [#allocation4], %s220
        %p222 = pneg %p76
        %p223 = pneg %p73
        %p224 = pneg %p102
        %p225 = pneg %p99
        %s226 = sand.u32 %s89, 1
        %s227 = scalar_lea.sflag [#allocation6], %s226
        %s228 = sand.u32 %s89, 1
        %s229 = scalar_lea.vmem [#allocation7], %s228
        %p230 = pneg %p128
        %p231 = pneg %p125
        %s232 = sand.u32 %s115, 1
        %s233 = scalar_lea.sflag [#allocation9], %s232
        %s234 = sand.u32 %s115, 1
        %s235 = smul.addr %s234, 16
        %s236 = scalar_lea.vmem [#allocation8], %s235
        %p237 = pneg %p154
        %p238 = pneg %p151
        %p239 = scmp.lt.s32.totalorder %s34, 5
        %s240 = scalar_select %p239, %s34, 5
        %s241 = smul.addr %s240, 2
        %s242 = smul.addr %s241, 8
        %s243 = scalar_lea.vmem %s5, %s242
        %p244 = scmp.lt.s32.totalorder %s34, 5
        %s245 = scalar_select %p244, %s34, 5
        %s246 = smul.addr %s245, 2
        %s247 = smul.addr %s246, 8
        %s248 = scalar_lea.vmem %s5, %s247
        %s249 = sld [smem:[#allocation3 + %s34]]
        %v250 = vld [vmem:[%s1] sm:$0xff]
        %v251 = vld [vmem:[%s1 + $0x8] sm:$0xff]
        %v252 = vld [vmem:[%s1 + $0x10] sm:$0xff]
        %v253 = vld [vmem:[%s1 + $0x18] sm:$0xff]
        %v254 = vld [vmem:[%s1 + $0x20] sm:$0xff]
        %v255 = vld [vmem:[%s1 + $0x28] sm:$0xff]
        %v256 = vld [vmem:[%s1 + $0x30] sm:$0xff]
        %v257 = vld [vmem:[%s1 + $0x38] sm:$0xff]
        %v258 = vld [vmem:[%s209] sm:$0xff]
        %v259 = vld [vmem:[%s209 + $0x8] sm:$0xff]
        %v260 = vlaneseq
        %v261 = vshrl.u32 %v260, 7
        %v262 = vadd.s32 %v261, 8
        %v263 = vstv %s249
        %vm264 = vcmp.lt.s32.totalorder %v261, %v263
        %vm265 = vcmp.lt.s32.totalorder %v262, %v263
        loop: start=0, step=1, limit=10
        $region33: #{tpu_custom_call.1} parent=27 // loop_pre_header
          _
        $region34: #{tpu_custom_call.1} parent=27 // loop_header
          %s267 = sphi 0, %s271
          %p268 = scmp.ge.s32.totalorder %s267, 10
          %v272 = vphi %v258, %v482
          %v273 = vphi %v259, %v483
          %v274 = vphi 0, %v484
          %v275 = vphi 0.0, %v485
          %v276 = vphi 0.0, %v486
          %v277 = vphi 0.0, %v489
        $region35: #{tpu_custom_call.1} parent=27 // loop_header_branch
          %270 = sbr.rel (%p268) target = $region39
        $region36: #{tpu_custom_call.1} parent=27 // loop_body
          %v278 = vmul.f32 %v272, %v272
          %v279 = vmul.f32 %v273, %v273
          %vm280 = vcmask 130048
          %v281 = vsel %vm280, %v278, 0.0
          %282 = vadd.xlane.f32.xlu0 %v281
          %v283 = vpop.xlane.xlu0 %282
          %v284 = vsel %vm280, %v279, 0.0
          %285 = vadd.xlane.f32.xlu0 %v284
          %v286 = vpop.xlane.xlu0 %285
          %v288 = vsel %vm280, %v272, 0
          %v291 = vsel %vm280, %v273, 0
          %v294 = vsel %vm280, %v250, 0
          %v297 = vsel %vm280, %v251, 0
          %v300 = vsel %vm280, %v252, 0
          %v303 = vsel %vm280, %v253, 0
          %v306 = vsel %vm280, %v254, 0
          %v309 = vsel %vm280, %v255, 0
          %v312 = vsel %vm280, %v256, 0
          %v315 = vsel %vm280, %v257, 0
          %317 = vmatpush.xpose.msra.mxu0 0.0
          %318 = vmatpush.xpose.msra.mxu0 0.0
          %319 = vmatpush.xpose.msra.mxu0 0.0
          %320 = vmatpush.xpose.msra.mxu0 0.0
          %321 = vmatpush.xpose.msra.mxu0 0.0
          %322 = vmatpush.xpose.msra.mxu0 0.0
          %323 = vmatpush.xpose.msra.mxu0 0.0
          %324 = vmatpush.xpose.msra.mxu0 0.0
          %325 = vmatpush.xpose.msra.mxu0 %v315
          %326 = vmatpush.xpose.msra.mxu0 %v312
          %327 = vmatpush.xpose.msra.mxu0 %v309
          %328 = vmatpush.xpose.msra.mxu0 %v306
          %329 = vmatpush.xpose.msra.mxu0 %v303
          %330 = vmatpush.xpose.msra.mxu0 %v300
          %331 = vmatpush.xpose.msra.mxu0 %v297
          %332 = vmatpush.xpose.msra.mxu0 %v294
          %333 = vmatmul.f32.gmra.mxu0 %v288
          %v334 = vpop.f32.mrf.mxu0
          %v335 = vadd.f32 0.0, %v334
          %336 = vmatmul.f32.gmra.mxu0 %v291
          %v337 = vpop.f32.mrf.mxu0
          %v338 = vadd.f32 0.0, %v337
          %339 = vdwg.mxu0
          %v340 = vmul.f32 %v335, 2.0
          %v341 = vmul.f32 %v338, 2.0
          %v342 = vsub.f32 %v283, %v340
          %v343 = vsub.f32 %v286, %v341
          %vm344 = vcmp.ne.f32.partialorder %v342, %v342
          %vm345 = vcmp.ne.f32.partialorder %v343, %v343
          %vm346 = vmxor %vm344, 1
          %vm347 = vmxor %vm345, 1
          %v348 = vsel %vm264, 1, 0
          %v349 = vsel %vm265, 1, 0
          %vm350 = vcmp.eq.s32.totalorder %v348, 1
          %vm351 = vcmp.eq.s32.totalorder %v349, 1
          %vm352 = vmand %vm350, %vm346
          %vm353 = vmand %vm351, %vm347
          %v354 = vsel %vm352, %v342, inf
          %v355 = vsel %vm353, %v343, inf
          %vm356 = vcmask 523264
          %v357 = vsel %vm356, %v354, inf
          %v358 = vsel %vm356, %v355, inf
          %v359 = vmin.f32 %v357, %v358
          %v360 = vrot.slane %v359, 4
          %v361 = vmin.f32 %v359, %v360
          %v362 = vrot.slane %v361, 2
          %v363 = vmin.f32 %v361, %v362
          %v364 = vrot.slane %v363, 1
          %v365 = vmin.f32 %v363, %v364
          %vm366 = vcmp.eq.f32.partialorder %v354, %v365
          %vm367 = vcmp.eq.f32.partialorder %v355, %v365
          %v368 = vsel %vm366, %v261, 16
          %v369 = vsel %vm367, %v262, 16
          %v370 = vsel %vm356, %v368, 2147483647
          %v371 = vsel %vm356, %v369, 2147483647
          %vm372 = vcmp.lt.s32.totalorder %v370, %v371
          %v373 = vsel %vm372, %v370, %v371
          %v374 = vrot.slane %v373, 4
          %vm375 = vcmp.lt.s32.totalorder %v373, %v374
          %v376 = vsel %vm375, %v373, %v374
          %v377 = vrot.slane %v376, 2
          %vm378 = vcmp.lt.s32.totalorder %v376, %v377
          %v379 = vsel %vm378, %v376, %v377
          %v380 = vrot.slane %v379, 1
          %vm381 = vcmp.lt.s32.totalorder %v379, %v380
          %v382 = vsel %vm381, %v379, %v380
          %vm383 = vcmp.eq.s32.totalorder %v382, %v261
          %vm384 = vcmp.eq.s32.totalorder %v382, %v262
          %v385 = vsel %vm383, 1, 0
          %v386 = vsel %vm384, 1, 0
          %v387 = vcvt.s32.f32 %v385
          %v388 = vcvt.s32.f32 %v386
          %v389 = vsel %vm356, %v387, 0.0
          %390 = vadd.xlane.f32.xlu0 %v389
          %v391 = vpop.xlane.xlu0 %390
          %v392 = vsel %vm356, %v388, 0.0
          %393 = vadd.xlane.f32.xlu0 %v392
          %v394 = vpop.xlane.xlu0 %393
          %v396 = vsel %vm356, %v387, 0
          %v399 = vsel %vm356, %v388, 0
          %401 = vmatpush.msra.mxu0 0.0
          %402 = vmatpush.msra.mxu0 0.0
          %403 = vmatpush.msra.mxu0 0.0
          %404 = vmatpush.msra.mxu0 0.0
          %405 = vmatpush.msra.mxu0 0.0
          %406 = vmatpush.msra.mxu0 0.0
          %407 = vmatpush.msra.mxu0 0.0
          %408 = vmatpush.msra.mxu0 0.0
          %409 = vmatpush.msra.mxu0 %v257
          %410 = vmatpush.msra.mxu0 %v256
          %411 = vmatpush.msra.mxu0 %v255
          %412 = vmatpush.msra.mxu0 %v254
          %413 = vmatpush.msra.mxu0 %v253
          %414 = vmatpush.msra.mxu0 %v252
          %415 = vmatpush.msra.mxu0 %v251
          %416 = vmatpush.msra.mxu0 %v250
          %417 = vmatmul.f32.gmra.mxu0 %v396
          %v418 = vpop.f32.mrf.mxu0
          %v419 = vadd.f32 0.0, %v418
          %420 = vmatmul.f32.gmra.mxu0 %v399
          %v421 = vpop.f32.mrf.mxu0
          %v422 = vadd.f32 0.0, %v421
          %423 = vdwg.mxu0
          %vm424 = vcmp.gt.f32.partialorder %v391, 0.0
          %vm425 = vcmp.gt.f32.partialorder %v394, 0.0
          %v426 = vsel %vm424, 1, 0
          %v427 = vsel %vm425, 1, 0
          %v428 = vcvt.s32.f32 %v426
          %v429 = vcvt.s32.f32 %v427
          %v430 = vadd.f32 %v428, %v429
          %v431 = vrot.slane %v430, 4
          %v432 = vadd.f32 %v430, %v431
          %v433 = vrot.slane %v432, 2
          %v434 = vadd.f32 %v432, %v433
          %v435 = vrot.slane %v434, 1
          %v436 = vadd.f32 %v434, %v435
          %s437 = scvt.s32.f32 %s249
          %v438 = vstv %s437
          %vm439 = vcmp.lt.f32.partialorder %v436, %v438
          %vm440 = vcmp.gt.f32.partialorder %v277, 0.5
          %p441 = scmp.gt.s32.totalorder %s267, 0
          %vm442 = vmxor %vm440, 1
          %s443 = scalar_select %p441, 1, 0
          %v444 = vstv %s443
          %vm445 = vcmp.eq.s32.totalorder %v444, 1
          %vm446 = vmand %vm445, %vm442
          %vm447 = vmand %vm439, %vm446
          %vm448 = vmxor %vm447, 1
          %vm449 = vmand %vm442, %vm448
          %v450 = vrcp.pop %v391
          %v451 = vmul.f32 %v391, %v450
          %v452 = vsub.f32 1.0, %v451
          %v453 = vmul.f32 %v450, %v452
          %v454 = vadd.f32 %v450, %v453
          %vm455 = vweird.f32 %v391
          %vm456 = vweird.f32 %v450
          %vm457 = vmor %vm455, %vm456
          %v458 = vsel %vm457, %v450, %v454
          %v459 = vand.u32 2147483647, %v391
          %vm460 = vcmp.eq.f32.partialorder %v459, 8.507059e+37
          %v461 = vand.u32 %v391, 2147483648
          %v462 = vor.u32 1.1754944e-38, %v461
          %v463 = vsel %vm460, %v462, %v458
          %v464 = vmul.f32 %v419, %v463
          %v465 = vrcp.pop %v394
          %v466 = vmul.f32 %v394, %v465
          %v467 = vsub.f32 1.0, %v466
          %v468 = vmul.f32 %v465, %v467
          %v469 = vadd.f32 %v465, %v468
          %vm470 = vweird.f32 %v394
          %vm471 = vweird.f32 %v465
          %vm472 = vmor %vm470, %vm471
          %v473 = vsel %vm472, %v465, %v469
          %v474 = vand.u32 2147483647, %v394
          %vm475 = vcmp.eq.f32.partialorder %v474, 8.507059e+37
          %v476 = vand.u32 %v394, 2147483648
          %v477 = vor.u32 1.1754944e-38, %v476
          %v478 = vsel %vm475, %v477, %v473
          %v479 = vmul.f32 %v422, %v478
          %v480 = vsel %vm449, 1, 0
          %vm481 = vcmp.eq.s32.totalorder %v480, 1
          %v482 = vsel %vm481, %v464, %v272
          %v483 = vsel %vm481, %v479, %v273
          %v484 = vsel %vm481, %v382, %v274
          %v485 = vsel %vm481, %v391, %v275
          %v486 = vsel %vm481, %v394, %v276
          %v487 = vsel %vm447, 1, 0
          %v488 = vcvt.s32.f32 %v487
          %v489 = vmax.f32 %v277, %v488
        $region37: #{tpu_custom_call.1} parent=27 // loop_footer
          %s271 = sadd.s32 1, %s267
        $region38: #{tpu_custom_call.1} parent=27 // loop_footer_branch
          %266 = sbr.rel target = $region34
        $region39: #{tpu_custom_call.1} parent=27 // loop_exit
          _
        %vm490 = vcmask 516096
        %491 = vst.msk [vmem:[%s229] sm:$0x1] %vm490, %v274
        %vm492 = vcmask 130048
        %493 = vst.msk [vmem:[%s236] sm:$0xff] %vm492, %v272
        %494 = vst.msk [vmem:[%s236 + $0x8] sm:$0xff] %vm492, %v273
        %vm495 = vcmask 7168
        %496 = vst.msk [vmem:[%s248] sm:$0xff] %vm495, %v275
        %497 = vst.msk [vmem:[%s248 + $0x8] sm:$0xff] %vm495, %v276
        %s498 = sand.u32 %s89, 1
        %s499 = scalar_lea.sflag [#allocation6], %s498
        %s500 = sand.u32 %s89, 1
        %s501 = scalar_lea.vmem [#allocation7], %s500
        %s502 = sand.u32 %s115, 1
        %s503 = scalar_lea.sflag [#allocation9], %s502
        %s504 = sand.u32 %s115, 1
        %s505 = smul.addr %s504, 16
        %s506 = scalar_lea.vmem [#allocation8], %s505
        %p507 = scmp.lt.s32.totalorder %s34, 5
        %s508 = scalar_select %p507, %s34, 5
        %s509 = smul.addr %s508, 2
        %s510 = smul.addr %s509, 8
        %s511 = scalar_lea.vmem %s5, %s510
        // Predicated region
        $region40: #{tpu_custom_call.1} parent=27 // pred_check
          %p512 = pneg %p99
        $region41: #{tpu_custom_call.1} parent=27 // pred_check_branch
          %514 = sbr.rel (%p512) target = $region43
        $region42: #{tpu_custom_call.1} parent=27 // pred_region
          %516 = vsyncadd %s499, 0
          %s517 = scalar_lea.hbm %s3, %s34
          %s519 = sshll.u32 %s501, 4
          %s520 = int_to_ptr.vmem [resolvable:$true] %s519
          %s521 = sshll.u32 %s517, 4
          %s522 = int_to_ptr.hbm [resolvable:$true] %s521
          %524 = dma.vmem_to_hbm [thread:$0]  %s520, 16, %s522, %s499
        $region43: #{tpu_custom_call.1} parent=27 // pred_fallthru
          _
        // Predicated region
        $region44: #{tpu_custom_call.1} parent=27 // pred_check
          %p525 = pneg %p125
        $region45: #{tpu_custom_call.1} parent=27 // pred_check_branch
          %527 = sbr.rel (%p525) target = $region47
        $region46: #{tpu_custom_call.1} parent=27 // pred_region
          %529 = vsyncadd %s503, 0
          %s530 = smul.addr %s34, 2
          %s531 = smul.addr %s530, 8
          %s532 = scalar_lea.hbm %s4, %s531
          %s533 = sshll.u32 %s506, 4
          %s534 = int_to_ptr.vmem [resolvable:$true] %s533
          %s535 = sshll.u32 %s532, 4
          %s536 = int_to_ptr.hbm [resolvable:$true] %s535
          %541 = dma.vmem_to_hbm [thread:$0]  %s534, 256, %s536, %s503, 128, 128, 8
        $region47: #{tpu_custom_call.1} parent=27 // pred_fallthru
          _
        // Predicated region
        $region48: #{tpu_custom_call.1} parent=27 // pred_check
          %p542 = pneg %p151
        $region49: #{tpu_custom_call.1} parent=27 // pred_check_branch
          %544 = sbr.rel (%p542) target = $region51
        $region50: #{tpu_custom_call.1} parent=27 // pred_region
          _
        $region51: #{tpu_custom_call.1} parent=27 // pred_fallthru
          _
      $region28: #{tpu_custom_call.1} parent=5 // pred_fallthru
        _
      %p545 = scmp.le.s32.totalorder 2, %s29
      // Predicated region
      $region52: #{tpu_custom_call.1} parent=5 // pred_check
        %p546 = pneg %p545
      $region53: #{tpu_custom_call.1} parent=5 // pred_check_branch
        %548 = sbr.rel (%p546) target = $region55
      $region54: #{tpu_custom_call.1} parent=5 // pred_region
        %s549 = ssub.s32 %s29, 2
        // Predicated region
        $region56: #{tpu_custom_call.1} parent=54 // pred_check
          %p550 = pneg %p105
        $region57: #{tpu_custom_call.1} parent=54 // pred_check_branch
          %552 = sbr.rel (%p550) target = $region59
        $region58: #{tpu_custom_call.1} parent=54 // pred_region
          %s553 = sand.u32 %s90, 1
          %s554 = scalar_lea.sflag [#allocation6], %s553
          %s555 = sand.u32 %s90, 1
          %s556 = scalar_lea.vmem [#allocation7], %s555
          %558 = dma.done %s554, 16
        $region59: #{tpu_custom_call.1} parent=54 // pred_fallthru
          _
        // Predicated region
        $region60: #{tpu_custom_call.1} parent=54 // pred_check
          %p559 = pneg %p131
        $region61: #{tpu_custom_call.1} parent=54 // pred_check_branch
          %561 = sbr.rel (%p559) target = $region63
        $region62: #{tpu_custom_call.1} parent=54 // pred_region
          %s562 = sand.u32 %s116, 1
          %s563 = scalar_lea.sflag [#allocation9], %s562
          %s564 = sand.u32 %s116, 1
          %s565 = smul.addr %s564, 16
          %s566 = scalar_lea.vmem [#allocation8], %s565
          %568 = dma.done %s563, 256
        $region63: #{tpu_custom_call.1} parent=54 // pred_fallthru
          _
        // Predicated region
        $region64: #{tpu_custom_call.1} parent=54 // pred_check
          %p569 = pneg %p157
        $region65: #{tpu_custom_call.1} parent=54 // pred_check_branch
          %571 = sbr.rel (%p569) target = $region67
        $region66: #{tpu_custom_call.1} parent=54 // pred_region
          %p572 = scmp.lt.s32.totalorder %s35, 5
          %s573 = scalar_select %p572, %s35, 5
          %s574 = smul.addr %s573, 2
          %s575 = smul.addr %s574, 8
          %s576 = scalar_lea.vmem %s5, %s575
        $region67: #{tpu_custom_call.1} parent=54 // pred_fallthru
          _
      $region55: #{tpu_custom_call.1} parent=5 // pred_fallthru
        _
    $region6: #{tpu_custom_call.1} parent=1 // loop_footer
      %s33 = sadd.s32 1, %s29
    $region7: #{tpu_custom_call.1} parent=1 // loop_footer_branch
      %28 = sbr.rel target = $region3
    $region8: #{tpu_custom_call.1} parent=1 // loop_exit
      _
    %577 = vsyncpa [#allocation5], 1
    %s578 = scalar_lea.sflag [#allocation5], 1
    %579 = vsyncpa %s578, 1
    %580 = vsyncpa [#allocation6], 1
    %s581 = scalar_lea.sflag [#allocation6], 1
    %582 = vsyncpa %s581, 1
    %583 = vsyncpa [#allocation9], 1
    %s584 = scalar_lea.sflag [#allocation9], 1
    %585 = vsyncpa %s584, 1

</llo_original>
